<compile_context>
chip_gen: v7x
topology: tpu7x:2x2x1
jax: 0.10.0
libtpu: 0.0.40
codegen_flags: <defaults>
</compile_context>

<pallas_src>
import functools

import jax
import jax.numpy as jnp
import numpy as np
from jax.experimental import pallas as pl
from jax.experimental.pallas import tpu as pltpu

SUBLANE = 8
LANE = 128


def _round_up(v, m):
    return ((v + m - 1) // m) * m


def _modular_form_kernel(x_ref, wa_ref, ba_ref, wb_ref, bb_ref,
                         out_ref, part_ref, *, batch, num_coeffs):
    """Fused two-head MLP + in-kernel metric partial sums.

    h   = SiLU(x @ Wa + ba)   Wa = [H, H + H//2]   (coeff_net.0 || symmetry_net.0)
    out = h @ Wb + bb         Wb = [H + H//2, P]   (block-diag W2/W4, lane-padded)
    part[0] row0 = sum over valid rows of ||q||_2   (first 2*num_coeffs columns)
    part[0] row1 = sum over valid rows of translation
    part[0] row2 = sum over valid rows of inversion
    Rows past the real batch (clipped last tile) are masked out of the sums.
    """
    tile_b = x_ref.shape[0]
    c2 = 2 * num_coeffs

    # f32 HBM read; bf16 cast for the MXU hides under DMA/MXU slack (VPU op).
    x = x_ref[...].astype(jnp.bfloat16)
    h = jnp.dot(x, wa_ref[...], preferred_element_type=jnp.float32)
    h = h + ba_ref[...]
    # SiLU in f32 (v5e has no bf16 VPU/EUP); exp + reciprocal go to the EUP slot.
    h = h * pl.reciprocal(1.0 + jnp.exp(-h), approx=True)
    out = (jnp.dot(h.astype(wb_ref.dtype), wb_ref[...],
                   preferred_element_type=jnp.float32) + bb_ref[...])
    out_ref[...] = out

    # ---- fused metric partial sums (VPU-slack work) ----
    i = pl.program_id(0)
    row = jax.lax.broadcasted_iota(jnp.int32, (tile_b, 1), 0) + i * tile_b
    masked = jnp.where(row < batch, out, 0.0)                 # zero padded rows

    col = jax.lax.broadcasted_iota(jnp.int32, masked.shape, 1)
    sq = masked * masked
    row_sq = jnp.sum(jnp.where(col < c2, sq, 0.0), axis=-1, keepdims=True)
    norm_sum = jnp.sum(jnp.sqrt(row_sq), keepdims=True)                    # (1,1)
    trans_sum = jnp.sum(jnp.where(col == c2, masked, 0.0), keepdims=True)  # (1,1)
    inv_sum = jnp.sum(jnp.where(col == c2 + 1, masked, 0.0), keepdims=True)

    rid = jax.lax.broadcasted_iota(jnp.int32, (SUBLANE, LANE), 0)
    blk = jnp.where(rid == 0, norm_sum,
                    jnp.where(rid == 1, trans_sum,
                              jnp.where(rid == 2, inv_sum, 0.0)))
    part_ref[0] = blk


def pack_params(raw_params, num_coeffs, out_pad=None):
    """Pack the 4 Linear layers into fused (Wa, ba, Wb, bb). Done once."""
    w1, b1, w2, b2, w3, b3, w4, b4 = raw_params
    H = w1.shape[0]
    Hh = w3.shape[1]
    c2 = 2 * num_coeffs
    n_out = c2 + 2
    if out_pad is None:
        out_pad = max(32, _round_up(n_out, 32))   # narrow output slab (4x < 128)
    assert n_out <= out_pad, "output width exceeds the padded lane width"

    # Layer A: concat the two first-layer weights along the output axis.
    wa = jnp.concatenate([w1, w3], axis=1)            # [H, H + Hh]
    ba = jnp.concatenate([b1, b3], axis=1)            # [1, H + Hh]

    # Layer B: block-diagonal second-layer weight, lane-padded to out_pad.
    wb = jnp.zeros((H + Hh, out_pad), jnp.float32)
    wb = wb.at[:H, :c2].set(w2)                        # coeff_net.2
    wb = wb.at[H:, c2:n_out].set(w4)                   # symmetry_net.2
    bb = jnp.zeros((1, out_pad), jnp.float32)
    bb = bb.at[:, :c2].set(b2[0])
    bb = bb.at[:, c2:n_out].set(b4[0])

    return (wa.astype(jnp.bfloat16), ba.astype(jnp.float32),
            wb.astype(jnp.bfloat16), bb.astype(jnp.float32))


def _pick_batch_tile(batch):
    b_up = _round_up(batch, SUBLANE)
    if b_up <= 512:
        return b_up
    # Big batches: up to 1024-row tiles, but keep >=2 grid steps so the
    # "parallel" axis shards across both v7x TensorCores.
    n_tiles = max(2, pl.cdiv(b_up, 1024))
    return min(1024, _round_up(pl.cdiv(b_up, n_tiles), SUBLANE))


def modular_form_forward(x, packed_params, num_coeffs):
    """Runs the Pallas kernel and assembles complex coefficients / metrics."""
    B, H = x.shape
    wa, ba, wb, bb = packed_params
    Na = wa.shape[1]          # H + H//2
    No = wb.shape[1]          # lane-padded output width (>= 2*num_coeffs + 2)

    tile_b = _pick_batch_tile(B)
    grid_b = pl.cdiv(B, tile_b)

    kernel = functools.partial(_modular_form_kernel, batch=B,
                               num_coeffs=num_coeffs)

    out, partials = pl.pallas_call(
        kernel,
        out_shape=(jax.ShapeDtypeStruct((B, No), jnp.float32),
                   jax.ShapeDtypeStruct((grid_b, SUBLANE, LANE), jnp.float32)),
        grid=(grid_b,),
        in_specs=[
            pl.BlockSpec((tile_b, H), lambda i: (i, 0)),   # x tile (f32 in HBM)
            # Constant-index weights/biases: VMEM resident across the grid.
            pl.BlockSpec((H, Na), lambda i: (0, 0)),       # Wa
            pl.BlockSpec((1, Na), lambda i: (0, 0)),       # ba
            pl.BlockSpec((Na, No), lambda i: (0, 0)),      # Wb
            pl.BlockSpec((1, No), lambda i: (0, 0)),       # bb
        ],
        out_specs=(
            pl.BlockSpec((tile_b, No), lambda i: (i, 0)),
            pl.BlockSpec((1, SUBLANE, LANE), lambda i: (i, 0, 0)),
        ),
        compiler_params=pltpu.CompilerParams(
            dimension_semantics=("parallel",)),
    )(x.astype(jnp.float32), wa, ba, wb, bb)

    # Glue: complex coefficients from the (already batch-exact) slab, metrics
    # from the in-kernel partial sums (no second pass over the slab).
    real = out[:, :num_coeffs]
    imag = out[:, num_coeffs:2 * num_coeffs]
    q_coeffs = jax.lax.complex(real, imag)

    sums = jnp.sum(partials[:, :3, 0], axis=0)     # (norm_sum, trans_sum, inv_sum)
    inv_b = 1.0 / B
    metrics = {
        "weight": 2,
        "level": 1,
        "q_norm": sums[0] * inv_b,
        "translation_param": sums[1] * inv_b,
        "inversion_param": sums[2] * inv_b,
    }
    return q_coeffs, metrics


def init_params(key, hidden_dim, num_coeffs):
    """PyTorch-Linear-style init (uniform +-1/sqrt(fan_in)); weights as [in, out]."""
    def linear(k, fan_in, fan_out):
        kw, kb = jax.random.split(k)
        bound = 1.0 / jnp.sqrt(fan_in)
        w = jax.random.uniform(kw, (fan_in, fan_out), jnp.float32, -bound, bound)
        b = jax.random.uniform(kb, (1, fan_out), jnp.float32, -bound, bound)
        return w, b

    k1, k2, k3, k4 = jax.random.split(key, 4)
    w1, b1 = linear(k1, hidden_dim, hidden_dim)                 # coeff_net.0
    w2, b2 = linear(k2, hidden_dim, num_coeffs * 2)             # coeff_net.2
    w3, b3 = linear(k3, hidden_dim, hidden_dim // 2)            # symmetry_net.0
    w4, b4 = linear(k4, hidden_dim // 2, 2)                     # symmetry_net.2
    return (w1, b1, w2, b2, w3, b3, w4, b4)


def reference_forward(x, raw_params, num_coeffs):
    """Pure-JAX f32 reference of the PyTorch module (for loose parity check)."""
    w1, b1, w2, b2, w3, b3, w4, b4 = raw_params

    def silu(v):
        return v * jax.nn.sigmoid(v)

    coeffs = silu(x @ w1 + b1) @ w2 + b2
    sym = silu(x @ w3 + b3) @ w4 + b4
    real = coeffs[:, :num_coeffs]
    imag = coeffs[:, num_coeffs:]
    q = jax.lax.complex(real, imag)
    metrics = {
        "q_norm": jnp.mean(jnp.sqrt(jnp.sum(real * real + imag * imag, axis=-1))),
        "translation_param": jnp.mean(sym[:, 0]),
        "inversion_param": jnp.mean(sym[:, 1]),
    }
    return q, metrics


if __name__ == "__main__":
    hidden_dim = 32
    num_coeffs = 10
    batch = 2

    key = jax.random.PRNGKey(0)
    k_x, k_p = jax.random.split(key)
    x = jax.random.normal(k_x, (batch, hidden_dim), dtype=jnp.float32)

    raw_params = init_params(k_p, hidden_dim, num_coeffs)
    packed = pack_params(raw_params, num_coeffs)

    q_coeffs, metrics = modular_form_forward(x, packed, num_coeffs)
    q_coeffs = jax.block_until_ready(q_coeffs)

    assert q_coeffs.shape == (batch, num_coeffs)
    assert q_coeffs.dtype == jnp.complex64

    # Loose parity vs. f32 reference (bf16 MXU operands + approx reciprocal
    # introduce ~1% relative error, well within these tolerances).
    q_ref, m_ref = reference_forward(x, raw_params, num_coeffs)
    assert np.allclose(np.asarray(q_coeffs), np.asarray(q_ref),
                       rtol=5e-2, atol=5e-2)
    for name in ("q_norm", "translation_param", "inversion_param"):
        assert abs(float(metrics[name]) - float(m_ref[name])) < 5e-2
    assert metrics["weight"] == 2 and metrics["level"] == 1

    print("KERNEL_OK")
</pallas_src>

<mosaic_0001>
module attributes {stable_mosaic.version = 11 : i64} {
  func.func @_modular_form_kernel(%arg0: i32, %arg1: memref<8x32xf32, #tpu.memory_space<vmem>>, %arg2: memref<32x48xbf16, #tpu.memory_space<vmem>>, %arg3: memref<1x48xf32, #tpu.memory_space<vmem>>, %arg4: memref<48x32xbf16, #tpu.memory_space<vmem>>, %arg5: memref<1x32xf32, #tpu.memory_space<vmem>>, %arg6: memref<8x32xf32, #tpu.memory_space<vmem>>, %arg7: memref<1x8x128xf32, #tpu.memory_space<vmem>>) attributes {dimension_semantics = [#tpu.dimension_semantics<parallel>], iteration_bounds = array<i64: 1>, scalar_prefetch = 0 : i64, scratch_operands = 0 : i64, tpu.core_type = #tpu.core_type<tc>, window_params = [{transform_indices = @transform_0, window_bounds = array<i64: 8, 32>}, {pipeline_mode = #tpu.pipeline_mode<synchronous>, transform_indices = @transform_1, window_bounds = array<i64: 32, 48>}, {pipeline_mode = #tpu.pipeline_mode<synchronous>, transform_indices = @transform_2, window_bounds = array<i64: 1, 48>}, {pipeline_mode = #tpu.pipeline_mode<synchronous>, transform_indices = @transform_3, window_bounds = array<i64: 48, 32>}, {pipeline_mode = #tpu.pipeline_mode<synchronous>, transform_indices = @transform_4, window_bounds = array<i64: 1, 32>}, {transform_indices = @transform_5, window_bounds = array<i64: 8, 32>}, {transform_indices = @transform_6, window_bounds = array<i64: 1, 8, 128>}]} {
    %c0 = arith.constant 0 : index
    %c0_0 = arith.constant 0 : index
    %0 = vector.load %arg1[%c0, %c0_0] : memref<8x32xf32, #tpu.memory_space<vmem>>, vector<8x32xf32>
    %1 = arith.truncf %0 : vector<8x32xf32> to vector<8x32xbf16>
    %c0_1 = arith.constant 0 : index
    %c0_2 = arith.constant 0 : index
    %2 = vector.load %arg2[%c0_1, %c0_2] : memref<32x48xbf16, #tpu.memory_space<vmem>>, vector<32x48xbf16>
    %cst = arith.constant dense<0.000000e+00> : vector<8x48xf32>
    %3 = tpu.matmul %1, %2, %cst {dimension_numbers = #tpu.dot_dimension_numbers<[1], [0], [0], [1], [0, 0, 1, 1], [], []>} : vector<8x32xbf16>, vector<32x48xbf16>, vector<8x48xf32> -> vector<8x48xf32>
    %c0_3 = arith.constant 0 : index
    %c0_4 = arith.constant 0 : index
    %4 = vector.load %arg3[%c0_3, %c0_4] : memref<1x48xf32, #tpu.memory_space<vmem>>, vector<1x48xf32>
    %5 = vector.broadcast %4 : vector<1x48xf32> to vector<8x48xf32>
    %6 = arith.addf %3, %5 : vector<8x48xf32>
    %cst_5 = arith.constant 0.000000e+00 : f32
    %7 = vector.broadcast %cst_5 : f32 to vector<8x48xf32>
    %8 = arith.subf %7, %6 : vector<8x48xf32>
    %9 = math.exp %8 : vector<8x48xf32>
    %cst_6 = arith.constant 1.000000e+00 : f32
    %10 = vector.broadcast %cst_6 : f32 to vector<8x48xf32>
    %11 = arith.addf %10, %9 : vector<8x48xf32>
    %12 = tpu.reciprocal %11 {approx = true} : vector<8x48xf32> -> vector<8x48xf32>
    %13 = arith.mulf %6, %12 : vector<8x48xf32>
    %14 = arith.truncf %13 : vector<8x48xf32> to vector<8x48xbf16>
    %c0_7 = arith.constant 0 : index
    %c0_8 = arith.constant 0 : index
    %15 = vector.load %arg4[%c0_7, %c0_8] : memref<48x32xbf16, #tpu.memory_space<vmem>>, vector<48x32xbf16>
    %cst_9 = arith.constant dense<0.000000e+00> : vector<8x32xf32>
    %16 = tpu.matmul %14, %15, %cst_9 {dimension_numbers = #tpu.dot_dimension_numbers<[1], [0], [0], [1], [0, 0, 1, 1], [], []>} : vector<8x48xbf16>, vector<48x32xbf16>, vector<8x32xf32> -> vector<8x32xf32>
    %c0_10 = arith.constant 0 : index
    %c0_11 = arith.constant 0 : index
    %17 = vector.load %arg5[%c0_10, %c0_11] : memref<1x32xf32, #tpu.memory_space<vmem>>, vector<1x32xf32>
    %18 = vector.broadcast %17 : vector<1x32xf32> to vector<8x32xf32>
    %19 = arith.addf %16, %18 : vector<8x32xf32>
    %c0_12 = arith.constant 0 : index
    %c0_13 = arith.constant 0 : index
    %20 = vector.load %arg6[%c0_12, %c0_13] : memref<8x32xf32, #tpu.memory_space<vmem>>, vector<8x32xf32>
    tpu.vector_store %arg6[%c0_12, %c0_13], %19 {strides = array<i32>} : memref<8x32xf32, #tpu.memory_space<vmem>>, vector<8x32xf32>,
    %21 = tpu.iota {dimensions = array<i32: 0>} : vector<8x1xi32>
    %c8_i32 = arith.constant 8 : i32
    %22 = arith.muli %arg0, %c8_i32 : i32
    %23 = vector.broadcast %22 : i32 to vector<8x1xi32>
    %24 = arith.addi %21, %23 : vector<8x1xi32>
    %c2_i32 = arith.constant 2 : i32
    %25 = vector.broadcast %c2_i32 : i32 to vector<8x1xi32>
    %26 = arith.cmpi slt, %24, %25 : vector<8x1xi32>
    %cst_14 = arith.constant 0.000000e+00 : f32
    %27 = vector.shape_cast %26 : vector<8x1xi1> to vector<8x1xi1>
    %28 = vector.broadcast %27 : vector<8x1xi1> to vector<8x32xi1>
    %29 = vector.broadcast %cst_14 : f32 to vector<8x32xf32>
    %30 = arith.select %28, %19, %29 : vector<8x32xi1>, vector<8x32xf32>
    %31 = tpu.iota {dimensions = array<i32: 1>} : vector<8x32xi32>
    %32 = arith.mulf %30, %30 : vector<8x32xf32>
    %c20_i32 = arith.constant 20 : i32
    %33 = vector.broadcast %c20_i32 : i32 to vector<8x32xi32>
    %34 = arith.cmpi slt, %31, %33 : vector<8x32xi32>
    %cst_15 = arith.constant 0.000000e+00 : f32
    %35 = vector.broadcast %cst_15 : f32 to vector<8x32xf32>
    %36 = arith.select %34, %32, %35 : vector<8x32xi1>, vector<8x32xf32>
    %cst_16 = arith.constant dense<0.000000e+00> : vector<8xf32>
    %37 = vector.multi_reduction <add>, %36, %cst_16 [1] : vector<8x32xf32> to vector<8xf32>
    %38 = vector.shape_cast %37 : vector<8xf32> to vector<8x1xf32>
    %39 = math.sqrt %38 : vector<8x1xf32>
    %40 = vector.shape_cast %39 : vector<8x1xf32> to vector<1x8x1xf32>
    %cst_17 = arith.constant dense<0.000000e+00> : vector<1xf32>
    %41 = vector.multi_reduction <add>, %40, %cst_17 [1, 2] : vector<1x8x1xf32> to vector<1xf32>
    %42 = vector.shape_cast %41 : vector<1xf32> to vector<1x1x1xf32>
    %43 = vector.extract %42[0, 0, 0] : f32 from vector<1x1x1xf32>
    %44 = vector.broadcast %43 : f32 to vector<1x1xf32>
    %c20_i32_18 = arith.constant 20 : i32
    %45 = vector.broadcast %c20_i32_18 : i32 to vector<8x32xi32>
    %46 = arith.cmpi eq, %31, %45 : vector<8x32xi32>
    %cst_19 = arith.constant 0.000000e+00 : f32
    %47 = vector.broadcast %cst_19 : f32 to vector<8x32xf32>
    %48 = arith.select %46, %30, %47 : vector<8x32xi1>, vector<8x32xf32>
    %49 = vector.shape_cast %48 : vector<8x32xf32> to vector<1x8x32xf32>
    %cst_20 = arith.constant dense<0.000000e+00> : vector<1xf32>
    %50 = vector.multi_reduction <add>, %49, %cst_20 [1, 2] : vector<1x8x32xf32> to vector<1xf32>
    %51 = vector.shape_cast %50 : vector<1xf32> to vector<1x1x1xf32>
    %52 = vector.extract %51[0, 0, 0] : f32 from vector<1x1x1xf32>
    %53 = vector.broadcast %52 : f32 to vector<1x1xf32>
    %c21_i32 = arith.constant 21 : i32
    %54 = vector.broadcast %c21_i32 : i32 to vector<8x32xi32>
    %55 = arith.cmpi eq, %31, %54 : vector<8x32xi32>
    %cst_21 = arith.constant 0.000000e+00 : f32
    %56 = vector.broadcast %cst_21 : f32 to vector<8x32xf32>
    %57 = arith.select %55, %30, %56 : vector<8x32xi1>, vector<8x32xf32>
    %58 = vector.shape_cast %57 : vector<8x32xf32> to vector<1x8x32xf32>
    %cst_22 = arith.constant dense<0.000000e+00> : vector<1xf32>
    %59 = vector.multi_reduction <add>, %58, %cst_22 [1, 2] : vector<1x8x32xf32> to vector<1xf32>
    %60 = vector.shape_cast %59 : vector<1xf32> to vector<1x1x1xf32>
    %61 = vector.extract %60[0, 0, 0] : f32 from vector<1x1x1xf32>
    %62 = vector.broadcast %61 : f32 to vector<1x1xf32>
    %63 = tpu.iota {dimensions = array<i32: 0>} : vector<8x128xi32>
    %c0_i32 = arith.constant 0 : i32
    %64 = vector.broadcast %c0_i32 : i32 to vector<8x128xi32>
    %65 = arith.cmpi eq, %63, %64 : vector<8x128xi32>
    %c1_i32 = arith.constant 1 : i32
    %66 = vector.broadcast %c1_i32 : i32 to vector<8x128xi32>
    %67 = arith.cmpi eq, %63, %66 : vector<8x128xi32>
    %c2_i32_23 = arith.constant 2 : i32
    %68 = vector.broadcast %c2_i32_23 : i32 to vector<8x128xi32>
    %69 = arith.cmpi eq, %63, %68 : vector<8x128xi32>
    %cst_24 = arith.constant 0.000000e+00 : f32
    %70 = vector.shape_cast %62 : vector<1x1xf32> to vector<1x1xf32>
    %71 = vector.broadcast %70 : vector<1x1xf32> to vector<8x128xf32>
    %72 = vector.broadcast %cst_24 : f32 to vector<8x128xf32>
    %73 = arith.select %69, %71, %72 : vector<8x128xi1>, vector<8x128xf32>
    %74 = vector.shape_cast %53 : vector<1x1xf32> to vector<1x1xf32>
    %75 = vector.broadcast %74 : vector<1x1xf32> to vector<8x128xf32>
    %76 = arith.select %67, %75, %73 : vector<8x128xi1>, vector<8x128xf32>
    %77 = vector.shape_cast %44 : vector<1x1xf32> to vector<1x1xf32>
    %78 = vector.broadcast %77 : vector<1x1xf32> to vector<8x128xf32>
    %79 = arith.select %65, %78, %76 : vector<8x128xi1>, vector<8x128xf32>
    %c0_25 = arith.constant 0 : index
    %c0_26 = arith.constant 0 : index
    %c0_27 = arith.constant 0 : index
    %80 = vector.load %arg7[%c0_25, %c0_26, %c0_27] : memref<1x8x128xf32, #tpu.memory_space<vmem>>, vector<1x8x128xf32>
    %81 = vector.shape_cast %80 : vector<1x8x128xf32> to vector<8x128xf32>
    %82 = vector.shape_cast %79 : vector<8x128xf32> to vector<1x8x128xf32>
    tpu.vector_store %arg7[%c0_25, %c0_26, %c0_27], %82 {strides = array<i32>} : memref<1x8x128xf32, #tpu.memory_space<vmem>>, vector<1x8x128xf32>,
    return
  }
  func.func @transform_0(%arg0: i32) -> (i32, i32) {
    %c0_i32 = arith.constant 0 : i32
    %c0_i32_0 = arith.constant 0 : i32
    return %arg0, %c0_i32 : i32, i32
  }
  func.func @transform_1(%arg0: i32) -> (i32, i32) {
    %c0_i32 = arith.constant 0 : i32
    %c0_i32_0 = arith.constant 0 : i32
    %c0_i32_1 = arith.constant 0 : i32
    return %c0_i32, %c0_i32_0 : i32, i32
  }
  func.func @transform_2(%arg0: i32) -> (i32, i32) {
    %c0_i32 = arith.constant 0 : i32
    %c0_i32_0 = arith.constant 0 : i32
    %c0_i32_1 = arith.constant 0 : i32
    return %c0_i32, %c0_i32_0 : i32, i32
  }
  func.func @transform_3(%arg0: i32) -> (i32, i32) {
    %c0_i32 = arith.constant 0 : i32
    %c0_i32_0 = arith.constant 0 : i32
    %c0_i32_1 = arith.constant 0 : i32
    return %c0_i32, %c0_i32_0 : i32, i32
  }
  func.func @transform_4(%arg0: i32) -> (i32, i32) {
    %c0_i32 = arith.constant 0 : i32
    %c0_i32_0 = arith.constant 0 : i32
    %c0_i32_1 = arith.constant 0 : i32
    return %c0_i32, %c0_i32_0 : i32, i32
  }
  func.func @transform_5(%arg0: i32) -> (i32, i32) {
    %c0_i32 = arith.constant 0 : i32
    %c0_i32_0 = arith.constant 0 : i32
    return %arg0, %c0_i32 : i32, i32
  }
  func.func @transform_6(%arg0: i32) -> (i32, i32, i32) {
    %c0_i32 = arith.constant 0 : i32
    %c0_i32_0 = arith.constant 0 : i32
    %c0_i32_1 = arith.constant 0 : i32
    return %arg0, %c0_i32, %c0_i32_0 : i32, i32, i32
  }
}

</mosaic_0001>

<llo_original>
// kernel: tpu_custom_call.1
$region0: #{tpu_custom_call.1}
  #allocation0 [shape = 'u32[]', space=smem, size = 0x4, offset = 0x4, fixed_abs, tag = 'smem constant byte address 0x4 - core index']
  #allocation1 [shape = 'u32[144,128]{1,0:T(1,128)}', space=vmem, size = 0x12000, scoped, tag = 'internal scratch']
  %s0 = inlined_call_operand.vmem [shape: f32[2,32], index: 0, kind: input, shape index: {}]
  %s1 = inlined_call_operand.vmem [shape: bf16[32,48], index: 1, kind: input, shape index: {}]
  %s2 = inlined_call_operand.vmem [shape: f32[1,48], index: 2, kind: input, shape index: {}]
  %s3 = inlined_call_operand.vmem [shape: bf16[48,32], index: 3, kind: input, shape index: {}]
  %s4 = inlined_call_operand.vmem [shape: f32[1,32], index: 4, kind: input, shape index: {}]
  %s5 = inlined_call_operand.hbm [shape: f32[2,32], index: 5, kind: output, shape index: {0}]
  %s6 = inlined_call_operand.hbm [shape: f32[1,8,128], index: 6, kind: output, shape index: {1}]
  %7 = xla_tuple %s5, %s6
  %s8 = sld [smem:[#allocation0]]
  $region38: #{tpu_custom_call.1} parent=0
    _
  %s10 = ssub.s32 1, %s8
  %s11 = scalar_select 0, %s10, %s8
  $region1: #{tpu_custom_call.1} parent=0
    #allocation2 [shape = 'u8[4096]{0}', space=vmem, size = 0x1000, scoped, tag = 'output window, operand 0, single buffered']
    #allocation3 [shape = 's32[1]{0}', space=sflag, size = 0x4, scoped, tag = 'scoped memory for tpu_custom_call.1']
    #allocation4 [shape = 'u8[4096]{0}', space=vmem, size = 0x1000, scoped, tag = 'output window, operand 1, single buffered']
    #allocation5 [shape = 's32[1]{0}', space=sflag, size = 0x4, scoped, tag = 'scoped memory for tpu_custom_call.1']
    %12 = vsyncpa [#allocation3], 0
    %13 = vsyncpa [#allocation5], 0
    // Predicated region
    $region2: #{tpu_custom_call.1} parent=1 // pred_check
      _
    $region3: #{tpu_custom_call.1} parent=1 // pred_check_branch
      %15 = sbr.rel (0) target = $region5
    $region4: #{tpu_custom_call.1} parent=1 // pred_region
      _
    $region5: #{tpu_custom_call.1} parent=1 // pred_fallthru
      _
    // Predicated region
    $region6: #{tpu_custom_call.1} parent=1 // pred_check
      _
    $region7: #{tpu_custom_call.1} parent=1 // pred_check_branch
      %17 = sbr.rel (0) target = $region9
    $region8: #{tpu_custom_call.1} parent=1 // pred_region
      _
    $region9: #{tpu_custom_call.1} parent=1 // pred_fallthru
      _
    // Predicated region
    $region10: #{tpu_custom_call.1} parent=1 // pred_check
      _
    $region11: #{tpu_custom_call.1} parent=1 // pred_check_branch
      %19 = sbr.rel (0) target = $region13
    $region12: #{tpu_custom_call.1} parent=1 // pred_region
      _
    $region13: #{tpu_custom_call.1} parent=1 // pred_fallthru
      _
    // Predicated region
    $region14: #{tpu_custom_call.1} parent=1 // pred_check
      _
    $region15: #{tpu_custom_call.1} parent=1 // pred_check_branch
      %21 = sbr.rel (0) target = $region17
    $region16: #{tpu_custom_call.1} parent=1 // pred_region
      _
    $region17: #{tpu_custom_call.1} parent=1 // pred_fallthru
      _
    // Predicated region
    $region18: #{tpu_custom_call.1} parent=1 // pred_check
      _
    $region19: #{tpu_custom_call.1} parent=1 // pred_check_branch
      %23 = sbr.rel (0) target = $region21
    $region20: #{tpu_custom_call.1} parent=1 // pred_region
      _
    $region21: #{tpu_custom_call.1} parent=1 // pred_fallthru
      _
    %v25 = vld [vmem:[%s0] sm:$0xff]
    %v26 = vpack.c.bf16 %v25, %v25
    %v27 = vld [vmem:[%s1] sm:$0xf]
    %v28 = vld [vmem:[%s1 + $0x4] sm:$0xf]
    %v29 = vld [vmem:[%s1 + $0x8] sm:$0xf]
    %v30 = vld [vmem:[%s1 + $0xc] sm:$0xf]
    %v31 = vld [vmem:[%s2] sm:$0x1]
    %v33 = vlaneseq
    %v34 = vshrl.u32 %v33, 7
    %v35 = vsub.s32 0, %v34
    %v36 = vrot.slane %v31, %v35
    %v42 = vunpack.c.l.b16 %v27
    %v43 = vunpack.c.l.b16 %v28
    %v44 = vunpack.c.l.b16 %v29
    %v45 = vunpack.c.l.b16 %v30
    %v46 = vpack.c.b16 %v43, %v42
    %v47 = vpack.c.b16 %v45, %v44
    %vm50 = vcmask 261120
    %v52 = vsel %vm50, %v26, 0
    %54 = vmatprep.subr.bf16.mxu0 0
    %55 = vmatpush1.bf16.msra.mxu0 %v46
    %56 = vmatprep.subr.bf16.mxu0 0
    %57 = vmatpush1.bf16.msra.mxu0 %v47
    %58 = vmatprep.subr.bf16.mxu0 0
    %59 = vmatpush1.bf16.msra.mxu0 0
    %60 = vmatprep.subr.bf16.mxu0 0
    %61 = vmatpush1.bf16.msra.mxu0 0
    %62 = vmatprep.subr.bf16.mxu0 0
    %63 = vmatpush1.bf16.msra.mxu0 0
    %64 = vmatprep.subr.bf16.mxu0 0
    %65 = vmatpush1.bf16.msra.mxu0 0
    %66 = vmatprep.subr.bf16.mxu0 0
    %67 = vmatpush1.bf16.msra.mxu0 0
    %68 = vmatprep.subr.bf16.mxu0 0
    %69 = vmatpush1.bf16.msra.mxu0 0
    %70 = vmatprep.subr.bf16.mxu0 0
    %71 = vmatpush1.bf16.msra.mxu0 0
    %72 = vmatprep.subr.bf16.mxu0 0
    %73 = vmatpush1.bf16.msra.mxu0 0
    %74 = vmatprep.subr.bf16.mxu0 0
    %75 = vmatpush1.bf16.msra.mxu0 0
    %76 = vmatprep.subr.bf16.mxu0 0
    %77 = vmatpush1.bf16.msra.mxu0 0
    %78 = vmatprep.subr.bf16.mxu0 0
    %79 = vmatpush1.bf16.msra.mxu0 0
    %80 = vmatprep.subr.bf16.mxu0 0
    %81 = vmatpush1.bf16.msra.mxu0 0
    %82 = vmatprep.subr.bf16.mxu0 0
    %83 = vmatpush1.bf16.msra.mxu0 0
    %84 = vmatprep.subr.bf16.mxu0 0
    %85 = vmatpush1.bf16.msra.mxu0 0
    %86 = vmatprep.mubr.bf16.mxu0 0
    %87 = vmatmul.mubr.bf16.gmra.mrb[0].mxu0 %v52
    %v88 = vpop.f32.mrb[0].mxu0
    %v89 = vadd.f32 %v36, %v88
    %v90 = vpop.f32.mrb[0].mxu0
    %v91 = vpop.f32.mrb[0].mxu0
    %v92 = vpop.f32.mrb[0].mxu0
    %93 = vdwg.mxu0
    %v94 = vsub.f32 0.0, %v89
    %v95 = vmul.f32 %v94, 1.442695
    %v96 = vpow.pop %v95
    %v97 = vadd.f32 %v96, 1.0
    %v98 = vrcp.pop %v97
    %v99 = vmul.f32 %v89, %v98
    %v100 = vpack.c.bf16 %v99, %v99
    %v101 = vld [vmem:[%s3] sm:$0xf]
    %v102 = vld [vmem:[%s3 + $0x4] sm:$0xf]
    %v103 = vld [vmem:[%s3 + $0x8] sm:$0xf]
    %v104 = vld [vmem:[%s3 + $0xc] sm:$0xf]
    %v105 = vld [vmem:[%s3 + $0x10] sm:$0xf]
    %v106 = vld [vmem:[%s3 + $0x14] sm:$0xf]
    %v107 = vld [vmem:[%s4] sm:$0x1]
    %v109 = vlaneseq
    %v110 = vshrl.u32 %v109, 7
    %v111 = vsub.s32 0, %v110
    %v112 = vrot.slane %v107, %v111
    %v120 = vunpack.c.l.b16 %v101
    %v121 = vunpack.c.l.b16 %v102
    %v122 = vunpack.c.l.b16 %v103
    %v123 = vunpack.c.l.b16 %v104
    %v124 = vunpack.c.l.b16 %v105
    %v125 = vunpack.c.l.b16 %v106
    %v126 = vpack.c.b16 %v121, %v120
    %v127 = vpack.c.b16 %v123, %v122
    %v128 = vpack.c.b16 %v125, %v124
    %vm132 = vcmask 392192
    %v134 = vsel %vm132, %v100, 0
    %136 = vmatprep.subr.bf16.mxu0 0
    %137 = vmatpush1.bf16.msra.mxu0 %v126
    %138 = vmatprep.subr.bf16.mxu0 0
    %139 = vmatpush1.bf16.msra.mxu0 %v127
    %140 = vmatprep.subr.bf16.mxu0 0
    %141 = vmatpush1.bf16.msra.mxu0 %v128
    %142 = vmatprep.subr.bf16.mxu0 0
    %143 = vmatpush1.bf16.msra.mxu0 0
    %144 = vmatprep.subr.bf16.mxu0 0
    %145 = vmatpush1.bf16.msra.mxu0 0
    %146 = vmatprep.subr.bf16.mxu0 0
    %147 = vmatpush1.bf16.msra.mxu0 0
    %148 = vmatprep.subr.bf16.mxu0 0
    %149 = vmatpush1.bf16.msra.mxu0 0
    %150 = vmatprep.subr.bf16.mxu0 0
    %151 = vmatpush1.bf16.msra.mxu0 0
    %152 = vmatprep.subr.bf16.mxu0 0
    %153 = vmatpush1.bf16.msra.mxu0 0
    %154 = vmatprep.subr.bf16.mxu0 0
    %155 = vmatpush1.bf16.msra.mxu0 0
    %156 = vmatprep.subr.bf16.mxu0 0
    %157 = vmatpush1.bf16.msra.mxu0 0
    %158 = vmatprep.subr.bf16.mxu0 0
    %159 = vmatpush1.bf16.msra.mxu0 0
    %160 = vmatprep.subr.bf16.mxu0 0
    %161 = vmatpush1.bf16.msra.mxu0 0
    %162 = vmatprep.subr.bf16.mxu0 0
    %163 = vmatpush1.bf16.msra.mxu0 0
    %164 = vmatprep.subr.bf16.mxu0 0
    %165 = vmatpush1.bf16.msra.mxu0 0
    %166 = vmatprep.subr.bf16.mxu0 0
    %167 = vmatpush1.bf16.msra.mxu0 0
    %168 = vmatprep.mubr.bf16.mxu0 0
    %169 = vmatmul.mubr.bf16.gmra.mrb[0].mxu0 %v134
    %v170 = vpop.f32.mrb[0].mxu0
    %v171 = vadd.f32 %v112, %v170
    %v172 = vpop.f32.mrb[0].mxu0
    %v173 = vpop.f32.mrb[0].mxu0
    %v174 = vpop.f32.mrb[0].mxu0
    %175 = vdwg.mxu0
    %176 = vst.msk [vmem:[#allocation2] sm:$0xff] %vm50, %v171
    %v177 = vlaneseq
    %v178 = vshrl.u32 %v177, 7
    %s179 = smul.u32 0, 8
    %v180 = vstv %s179
    %v181 = vadd.s32 %v178, %v180
    %vm182 = vcmp.lt.s32.totalorder %v181, 2
    %v183 = vsel %vm182, 1, 0
    %vm184 = vcmp.eq.s32.totalorder %v183, 1
    %v185 = vsel %vm184, %v171, 0.0
    %v186 = vlaneseq
    %v187 = vand.u32 %v186, 127
    %v188 = vmul.f32 %v185, %v185
    %vm189 = vcmp.lt.s32.totalorder %v187, 20
    %v190 = vsel %vm189, %v188, 0.0
    %v191 = vsel %vm50, %v190, 0.0
    %192 = vadd.xlane.f32.xlu0 %v191
    %v193 = vpop.xlane.xlu0 %192
    %v194 = vrsqrt.pop %v193
    %v195 = vmul.f32 %v193, %v194
    %vm196 = vcmp.eq.f32.partialorder %v193, inf
    %v197 = vsel %vm196, %v193, %v195
    %vm198 = vcmp.eq.f32.partialorder %v193, 0.0
    %v199 = vand.u32 %v193, 2147483648
    %v200 = vsel %vm198, %v199, %v197
    %vm201 = vcmask 7168
    %v202 = vsel %vm201, %v200, 0.0
    %203 = vadd.xlane.f32.xlu0 %v202
    %v204 = vpop.xlane.xlu0 %203
    %v205 = vrot.slane %v204, 4
    %v206 = vadd.f32 %v204, %v205
    %v207 = vrot.slane %v206, 2
    %v208 = vadd.f32 %v206, %v207
    %v209 = vrot.slane %v208, 1
    %v210 = vadd.f32 %v208, %v209
    %s211 = vtos %v210
    %vm212 = vcmp.eq.s32.totalorder %v187, 20
    %v213 = vsel %vm212, %v185, 0.0
    %v214 = vsel %vm50, %v213, 0.0
    %215 = vadd.xlane.f32.xlu0 %v214
    %v216 = vpop.xlane.xlu0 %215
    %v217 = vrot.slane %v216, 4
    %v218 = vadd.f32 %v216, %v217
    %v219 = vrot.slane %v218, 2
    %v220 = vadd.f32 %v218, %v219
    %v221 = vrot.slane %v220, 1
    %v222 = vadd.f32 %v220, %v221
    %s223 = vtos %v222
    %vm224 = vcmp.eq.s32.totalorder %v187, 21
    %v225 = vsel %vm224, %v185, 0.0
    %v226 = vsel %vm50, %v225, 0.0
    %227 = vadd.xlane.f32.xlu0 %v226
    %v228 = vpop.xlane.xlu0 %227
    %v229 = vrot.slane %v228, 4
    %v230 = vadd.f32 %v228, %v229
    %v231 = vrot.slane %v230, 2
    %v232 = vadd.f32 %v230, %v231
    %v233 = vrot.slane %v232, 1
    %v234 = vadd.f32 %v232, %v233
    %s235 = vtos %v234
    %vm236 = vcmp.eq.s32.totalorder %v178, 0
    %vm237 = vcmp.eq.s32.totalorder %v178, 1
    %vm238 = vcmp.eq.s32.totalorder %v178, 2
    %v239 = vstv %s235
    %v240 = vsel %vm238, %v239, 0.0
    %v241 = vstv %s223
    %v242 = vsel %vm237, %v241, %v240
    %v243 = vstv %s211
    %v244 = vsel %vm236, %v243, %v242
    %245 = vst [vmem:[#allocation4] sm:$0xff] %v244
    // Predicated region
    $region22: #{tpu_custom_call.1} parent=1 // pred_check
      _
    $region23: #{tpu_custom_call.1} parent=1 // pred_check_branch
      %247 = sbr.rel (0) target = $region25
    $region24: #{tpu_custom_call.1} parent=1 // pred_region
      %s249 = ssub.s32 128, 32
      %250 = vsyncadd [#allocation3], %s249
      %s251 = sshll.u32 [#allocation2], 4
      %s252 = int_to_ptr.vmem [resolvable:$true] %s251
      %257 = dma.vmem_to_hbm [thread:$0]  %s252, 32, %s5, [#allocation3], 32, 32, 2
    $region25: #{tpu_custom_call.1} parent=1 // pred_fallthru
      _
    // Predicated region
    $region26: #{tpu_custom_call.1} parent=1 // pred_check
      _
    $region27: #{tpu_custom_call.1} parent=1 // pred_check_branch
      %259 = sbr.rel (0) target = $region29
    $region28: #{tpu_custom_call.1} parent=1 // pred_region
      %s261 = ssub.s32 128, 128
      %262 = vsyncadd [#allocation5], %s261
      %s264 = sshll.u32 [#allocation4], 4
      %s265 = int_to_ptr.vmem [resolvable:$true] %s264
      %267 = dma.vmem_to_hbm [thread:$0]  %s265, 128, %s6, [#allocation5]
    $region29: #{tpu_custom_call.1} parent=1 // pred_fallthru
      _
    // Predicated region
    $region30: #{tpu_custom_call.1} parent=1 // pred_check
      _
    $region31: #{tpu_custom_call.1} parent=1 // pred_check_branch
      %269 = sbr.rel (0) target = $region33
    $region32: #{tpu_custom_call.1} parent=1 // pred_region
      %270 = dma.done [#allocation3], 128
    $region33: #{tpu_custom_call.1} parent=1 // pred_fallthru
      _
    // Predicated region
    $region34: #{tpu_custom_call.1} parent=1 // pred_check
      _
    $region35: #{tpu_custom_call.1} parent=1 // pred_check_branch
      %272 = sbr.rel (0) target = $region37
    $region36: #{tpu_custom_call.1} parent=1 // pred_region
      %273 = dma.done [#allocation5], 128
    $region37: #{tpu_custom_call.1} parent=1 // pred_fallthru
      _
    %274 = vsyncpa [#allocation3], 1
    %275 = vsyncpa [#allocation5], 1

</llo_original>
